<compile_context>
chip_gen: v7x
topology: tpu7x:2x2x1
jax: 0.10.0
libtpu: 0.0.40
codegen_flags: <defaults>
</compile_context>

<pallas_src>
import functools

import numpy as np
import jax
import jax.numpy as jnp
from jax.experimental import pallas as pl
from jax.experimental.pallas import tpu as pltpu


OUT_HW = 8                     # branch-4 pool size == target pyramid level -> 8x8 output
OUT_PIX = OUT_HW * OUT_HW      # 64 output pixels per batch element
POOL_COLS = 256                # padded lane width of the folded pooling operator
MEAN_COL = 3 * OUT_PIX         # lane 192 holds the branch-1 global mean


# ---------------------------------------------------------------------------
# Fixed linear-operator construction (pooling / bilinear-resize matrices)
# ---------------------------------------------------------------------------
def _adaptive_pool_matrix_1d(in_size, out_size):
    """Row-stochastic (out_size, in_size) matrix matching nn.AdaptiveAvgPool."""
    m = np.zeros((out_size, in_size), dtype=np.float64)
    for i in range(out_size):
        start = (i * in_size) // out_size
        end = -((-(i + 1) * in_size) // out_size)  # ceil
        m[i, start:end] = 1.0 / float(end - start)
    return m


def _bilinear_matrix_1d(in_size, out_size):
    """(out_size, in_size) matrix matching F.interpolate bilinear, align_corners=False."""
    m = np.zeros((out_size, in_size), dtype=np.float64)
    if in_size == 1:
        m[:, 0] = 1.0
        return m
    scale = in_size / out_size
    for i in range(out_size):
        src = max((i + 0.5) * scale - 0.5, 0.0)
        i0 = min(int(np.floor(src)), in_size - 1)
        i1 = min(i0 + 1, in_size - 1)
        frac = src - i0
        m[i, i0] += 1.0 - frac
        m[i, i1] += frac
    return m


@functools.lru_cache(maxsize=None)
def _pool_operator_np(H, W):
    """Folded (HW, 256) operator: columns [up8@pool2 | up8@pool3 | pool8 | mean | 0]."""
    HW = H * W
    p2 = np.kron(_adaptive_pool_matrix_1d(H, 2), _adaptive_pool_matrix_1d(W, 2))  # (4,  HW)
    p3 = np.kron(_adaptive_pool_matrix_1d(H, 4), _adaptive_pool_matrix_1d(W, 4))  # (16, HW)
    p4 = np.kron(_adaptive_pool_matrix_1d(H, 8), _adaptive_pool_matrix_1d(W, 8))  # (64, HW)
    u2 = np.kron(_bilinear_matrix_1d(2, OUT_HW), _bilinear_matrix_1d(2, OUT_HW))  # (64, 4)
    u3 = np.kron(_bilinear_matrix_1d(4, OUT_HW), _bilinear_matrix_1d(4, OUT_HW))  # (64, 16)
    m = np.zeros((HW, POOL_COLS), dtype=np.float32)
    m[:, 0 * OUT_PIX:1 * OUT_PIX] = (u2 @ p2).T       # branch 2: pool(2) -> up(8)
    m[:, 1 * OUT_PIX:2 * OUT_PIX] = (u3 @ p3).T       # branch 3: pool(4) -> up(8)
    m[:, 2 * OUT_PIX:3 * OUT_PIX] = p4.T              # branch 4: pool(8)
    m[:, MEAN_COL] = 1.0 / HW                         # branch 1: AdaptiveAvgPool2d(1)
    return m                                          # cols 193..255 stay zero


# ---------------------------------------------------------------------------
# Host-side parameter folding: conv1..4 + fusion + BatchNorm(eval) -> one array
#   packed[o, k*C + c] = bn_scale[o] * sum_u fusion_w[o, k, u] * conv_w[k, u, c]
#   packed[o, 4*C]     = bn_scale[o] * (sum_{k,u} fusion_w[o,k,u]*conv_b[k,u]
#                                       + fusion_b[o]) + bn_shift[o]
# ---------------------------------------------------------------------------
def fold_params(raw_params):
    conv_w, conv_b, fusion_w, fusion_b, gamma, beta, rmean, rvar = raw_params
    n_branch, out_ch, c_in = conv_w.shape
    eps = 1e-5
    bn_scale = gamma / jnp.sqrt(rvar + eps)                        # (OUT,)
    bn_shift = beta - rmean * bn_scale                             # (OUT,)
    wf = fusion_w.reshape(out_ch, n_branch, out_ch)                # [o, branch, u]
    a = jnp.einsum('oku,kuc->koc', wf, conv_w)                     # (4, OUT, C)
    bias_total = jnp.einsum('oku,ku->o', wf, conv_b) + fusion_b    # (OUT,)
    wt = a * bn_scale[None, :, None]                               # BN scale folded in
    shift = bn_scale * bias_total + bn_shift                       # all biases + BN shift
    wcat = jnp.transpose(wt, (1, 0, 2)).reshape(out_ch, n_branch * c_in)  # col j = k*C + c
    return jnp.concatenate([wcat, shift[:, None]], axis=1).astype(jnp.float32)  # (OUT, 4C+1)


# ---------------------------------------------------------------------------
# Pallas kernel (single grid step processes the whole batch)
# ---------------------------------------------------------------------------
def _fpn_kernel(x_ref, mt_ref, w_ref, o_ref, z_ref, *, n_batch, c_in):
    f32 = jnp.float32
    npix = OUT_PIX

    # Stage 1: all pooling branches (+ branch-1 global mean) as ONE bf16 MXU
    # matmul with f32 accumulation.
    #   pooled[n*C + c, :] = [ up8(pool2 x) | up8(pool3 x) | pool8 x | mean(x) | 0 ]
    pooled = jnp.dot(x_ref[...], mt_ref[...], preferred_element_type=f32)  # (N*C, 256)

    # Rearrange the tiny pooled block into the single fusion operand
    #   Z[k*C + c, n*64 + p] = pooled_branch_k[n, c, p]
    # (branch index: lanes -> sublanes, batch index: sublanes -> lanes) using a
    # handful of small masked stores into an 8 KiB VMEM scratch.
    for n in range(n_batch):                      # static python loop (n_batch == 2)
        pb = pooled[n * c_in:(n + 1) * c_in, :]                       # (C, 256)
        lo, hi = n * npix, (n + 1) * npix
        z_ref[0 * c_in:1 * c_in, lo:hi] = jnp.broadcast_to(
            pb[:, MEAN_COL:MEAN_COL + 1], (c_in, npix))               # branch 1 (mean)
        z_ref[1 * c_in:2 * c_in, lo:hi] = pb[:, 0 * npix:1 * npix]    # branch 2
        z_ref[2 * c_in:3 * c_in, lo:hi] = pb[:, 1 * npix:2 * npix]    # branch 3
        z_ref[3 * c_in:4 * c_in, lo:hi] = pb[:, 2 * npix:3 * npix]    # branch 4

    # Stage 2: conv1..4 + fusion conv + BN scale as ONE f32 matmul; every bias
    # and the BN shift live in the last packed-weight column; fused ReLU.
    # Output tile is (OUT, N*64) = 128 dense lanes -> unmasked stores.
    w = w_ref[...]                                                    # (OUT, 4*C + 1)
    fused = (jnp.dot(w[:, :4 * c_in], z_ref[...], preferred_element_type=f32)
             + w[:, 4 * c_in:4 * c_in + 1])                           # (OUT, N*64)
    o_ref[...] = jnp.maximum(fused, 0.0)


# ---------------------------------------------------------------------------
# Wrapper (jitted: operator construction + parameter folding happen at trace time)
# ---------------------------------------------------------------------------
@jax.jit
def fpn_pallas(x_nchw, raw_params):
    N, C, H, W = x_nchw.shape
    HW = H * W
    w_packed = fold_params(raw_params)                                # (OUT, 4*C + 1) f32
    out_ch = w_packed.shape[0]
    mt = jnp.asarray(_pool_operator_np(H, W), jnp.bfloat16)           # (HW, 256) bf16

    # Native NCHW: metadata-only reshape; bf16 cast done in the producer (XLA).
    xb = x_nchw.reshape(N * C, HW).astype(jnp.bfloat16)

    kernel = functools.partial(_fpn_kernel, n_batch=N, c_in=C)
    out = pl.pallas_call(
        kernel,
        out_shape=jax.ShapeDtypeStruct((out_ch, N * OUT_PIX), jnp.float32),
        grid=(1,),                                                    # single step, whole batch
        in_specs=[
            pl.BlockSpec((N * C, HW), lambda i: (0, 0)),              # x (bf16)
            pl.BlockSpec((HW, POOL_COLS), lambda i: (0, 0)),          # folded pooling operator
            pl.BlockSpec((out_ch, 4 * C + 1), lambda i: (0, 0)),      # packed weights + shift
        ],
        out_specs=pl.BlockSpec((out_ch, N * OUT_PIX), lambda i: (0, 0)),
        scratch_shapes=[pltpu.VMEM((4 * C, N * OUT_PIX), jnp.float32)],
    )(xb, mt, w_packed)

    # (OUT, N*64) -> NCHW (N, OUT, 8, 8): tiny wrapper-side transpose of the output.
    return out.reshape(out_ch, N, OUT_HW, OUT_HW).transpose(1, 0, 2, 3)


# ---------------------------------------------------------------------------
# Pure-JAX reference: unfolded op sequence matching the PyTorch module (f32)
# ---------------------------------------------------------------------------
def fpn_reference(x_nchw, raw_params):
    conv_w, conv_b, fusion_w, fusion_b, gamma, beta, rmean, rvar = raw_params
    N, C, H, W = x_nchw.shape
    out_ch = conv_w.shape[1]
    HW = H * W
    xf = x_nchw.reshape(N, C, HW).astype(jnp.float32)

    p_list = [np.kron(_adaptive_pool_matrix_1d(H, k), _adaptive_pool_matrix_1d(W, k))
              for k in (1, 2, 4, 8)]
    u_list = [np.ones((OUT_PIX, 1)),
              np.kron(_bilinear_matrix_1d(2, 8), _bilinear_matrix_1d(2, 8)),
              np.kron(_bilinear_matrix_1d(4, 8), _bilinear_matrix_1d(4, 8)),
              np.eye(OUT_PIX)]

    bn_scale = gamma / jnp.sqrt(rvar + 1e-5)
    bn_shift = beta - rmean * bn_scale
    wf = fusion_w.reshape(out_ch, 4, out_ch)

    fused = jnp.zeros((N, OUT_PIX, out_ch), jnp.float32) + fusion_b
    for k in range(4):
        P = jnp.asarray(p_list[k], jnp.float32)
        U = jnp.asarray(u_list[k], jnp.float32)
        pooled = jnp.einsum('qp,ncp->nqc', P, xf)                    # (N, k*k, C)
        f = jnp.einsum('nqc,oc->nqo', pooled, conv_w[k]) + conv_b[k] # (N, k*k, OUT)
        up = jnp.einsum('pq,nqo->npo', U, f)                         # (N, 64, OUT)
        fused = fused + jnp.einsum('npo,vo->npv', up, wf[:, k, :])   # (N, 64, OUT)

    out = jnp.maximum(fused * bn_scale + bn_shift, 0.0)
    return out.reshape(N, 8, 8, out_ch).transpose(0, 3, 1, 2)        # NCHW


def init_raw_params(key, in_channels, out_channels):
    """Deterministic synthetic parameters (shapes match the PyTorch __init__)."""
    ks = jax.random.split(key, 8)
    conv_w = 0.1 * jax.random.normal(ks[0], (4, out_channels, in_channels), jnp.float32)
    conv_b = 0.05 * jax.random.normal(ks[1], (4, out_channels), jnp.float32)
    fusion_w = 0.05 * jax.random.normal(ks[2], (out_channels, 4 * out_channels), jnp.float32)
    fusion_b = 0.05 * jax.random.normal(ks[3], (out_channels,), jnp.float32)
    gamma = 1.0 + 0.1 * jax.random.normal(ks[4], (out_channels,), jnp.float32)
    beta = 0.1 * jax.random.normal(ks[5], (out_channels,), jnp.float32)
    rmean = 0.1 * jax.random.normal(ks[6], (out_channels,), jnp.float32)
    rvar = 1.0 + 0.1 * jnp.abs(jax.random.normal(ks[7], (out_channels,), jnp.float32))
    return conv_w, conv_b, fusion_w, fusion_b, gamma, beta, rmean, rvar


if __name__ == "__main__":
    N, C_IN, H, W, OUT = 2, 4, 16, 16, 32
    key = jax.random.PRNGKey(0)
    kx, kp = jax.random.split(key)
    x = jax.random.normal(kx, (N, C_IN, H, W), jnp.float32)
    raw_params = init_raw_params(kp, C_IN, OUT)

    y = fpn_pallas(x, raw_params)
    y = jax.block_until_ready(y)
    assert y.shape == (N, OUT, 8, 8), y.shape

    y_ref = fpn_reference(x, raw_params)
    # bf16 x on the pooling matmul (f32 accumulation; bf16 pooling operator is
    # exact for 16x16) -> loosened tolerance.
    np.testing.assert_allclose(np.asarray(y), np.asarray(y_ref), atol=1e-2, rtol=1e-2)
    print("KERNEL_OK")
</pallas_src>

<mosaic_0001>
module attributes {stable_mosaic.version = 11 : i64} {
  func.func @_fpn_kernel(%arg0: i32, %arg1: memref<8x256xbf16, #tpu.memory_space<vmem>>, %arg2: memref<256x256xbf16, #tpu.memory_space<vmem>>, %arg3: memref<32x17xf32, #tpu.memory_space<vmem>>, %arg4: memref<32x128xf32, #tpu.memory_space<vmem>>, %arg5: memref<16x128xf32, #tpu.memory_space<vmem>>) attributes {dimension_semantics = [#tpu.dimension_semantics<arbitrary>], iteration_bounds = array<i64: 1>, scalar_prefetch = 0 : i64, scratch_operands = 1 : i64, tpu.core_type = #tpu.core_type<tc>, window_params = [{pipeline_mode = #tpu.pipeline_mode<synchronous>, transform_indices = @transform_0, window_bounds = array<i64: 8, 256>}, {pipeline_mode = #tpu.pipeline_mode<synchronous>, transform_indices = @transform_1, window_bounds = array<i64: 256, 256>}, {pipeline_mode = #tpu.pipeline_mode<synchronous>, transform_indices = @transform_2, window_bounds = array<i64: 32, 17>}, {pipeline_mode = #tpu.pipeline_mode<synchronous>, transform_indices = @transform_3, window_bounds = array<i64: 32, 128>}]} {
    %c0 = arith.constant 0 : index
    %c0_0 = arith.constant 0 : index
    %0 = vector.load %arg1[%c0, %c0_0] : memref<8x256xbf16, #tpu.memory_space<vmem>>, vector<8x256xbf16>
    %c0_1 = arith.constant 0 : index
    %c0_2 = arith.constant 0 : index
    %1 = vector.load %arg2[%c0_1, %c0_2] : memref<256x256xbf16, #tpu.memory_space<vmem>>, vector<256x256xbf16>
    %cst = arith.constant dense<0.000000e+00> : vector<8x256xf32>
    %2 = tpu.matmul %0, %1, %cst {dimension_numbers = #tpu.dot_dimension_numbers<[1], [0], [0], [1], [0, 0, 1, 1], [], []>} : vector<8x256xbf16>, vector<256x256xbf16>, vector<8x256xf32> -> vector<8x256xf32>
    %3 = vector.extract_strided_slice %2 {offsets = [0, 0], sizes = [4, 256], strides = [1, 1]} : vector<8x256xf32> to vector<4x256xf32>
    %4 = vector.extract_strided_slice %3 {offsets = [0, 192], sizes = [4, 1], strides = [1, 1]} : vector<4x256xf32> to vector<4x1xf32>
    %5 = vector.shape_cast %4 : vector<4x1xf32> to vector<4x1xf32>
    %6 = vector.broadcast %5 : vector<4x1xf32> to vector<4x64xf32>
    %c0_3 = arith.constant 0 : index
    %c0_4 = arith.constant 0 : index
    %7 = vector.load %arg5[%c0_3, %c0_4] : memref<16x128xf32, #tpu.memory_space<vmem>>, vector<4x64xf32>
    tpu.vector_store %arg5[%c0_3, %c0_4], %6 {strides = array<i32>} : memref<16x128xf32, #tpu.memory_space<vmem>>, vector<4x64xf32>,
    %8 = vector.extract_strided_slice %3 {offsets = [0, 0], sizes = [4, 64], strides = [1, 1]} : vector<4x256xf32> to vector<4x64xf32>
    %c4 = arith.constant 4 : index
    %c0_5 = arith.constant 0 : index
    %9 = vector.load %arg5[%c4, %c0_5] : memref<16x128xf32, #tpu.memory_space<vmem>>, vector<4x64xf32>
    tpu.vector_store %arg5[%c4, %c0_5], %8 {strides = array<i32>} : memref<16x128xf32, #tpu.memory_space<vmem>>, vector<4x64xf32>,
    %10 = vector.extract_strided_slice %3 {offsets = [0, 64], sizes = [4, 64], strides = [1, 1]} : vector<4x256xf32> to vector<4x64xf32>
    %c8 = arith.constant 8 : index
    %c0_6 = arith.constant 0 : index
    %11 = vector.load %arg5[%c8, %c0_6] : memref<16x128xf32, #tpu.memory_space<vmem>>, vector<4x64xf32>
    tpu.vector_store %arg5[%c8, %c0_6], %10 {strides = array<i32>} : memref<16x128xf32, #tpu.memory_space<vmem>>, vector<4x64xf32>,
    %12 = vector.extract_strided_slice %3 {offsets = [0, 128], sizes = [4, 64], strides = [1, 1]} : vector<4x256xf32> to vector<4x64xf32>
    %c12 = arith.constant 12 : index
    %c0_7 = arith.constant 0 : index
    %13 = vector.load %arg5[%c12, %c0_7] : memref<16x128xf32, #tpu.memory_space<vmem>>, vector<4x64xf32>
    tpu.vector_store %arg5[%c12, %c0_7], %12 {strides = array<i32>} : memref<16x128xf32, #tpu.memory_space<vmem>>, vector<4x64xf32>,
    %14 = vector.extract_strided_slice %2 {offsets = [4, 0], sizes = [4, 256], strides = [1, 1]} : vector<8x256xf32> to vector<4x256xf32>
    %15 = vector.extract_strided_slice %14 {offsets = [0, 192], sizes = [4, 1], strides = [1, 1]} : vector<4x256xf32> to vector<4x1xf32>
    %16 = vector.shape_cast %15 : vector<4x1xf32> to vector<4x1xf32>
    %17 = vector.broadcast %16 : vector<4x1xf32> to vector<4x64xf32>
    %c0_8 = arith.constant 0 : index
    %c64 = arith.constant 64 : index
    %18 = vector.load %arg5[%c0_8, %c64] : memref<16x128xf32, #tpu.memory_space<vmem>>, vector<4x64xf32>
    tpu.vector_store %arg5[%c0_8, %c64], %17 {strides = array<i32>} : memref<16x128xf32, #tpu.memory_space<vmem>>, vector<4x64xf32>,
    %19 = vector.extract_strided_slice %14 {offsets = [0, 0], sizes = [4, 64], strides = [1, 1]} : vector<4x256xf32> to vector<4x64xf32>
    %c4_9 = arith.constant 4 : index
    %c64_10 = arith.constant 64 : index
    %20 = vector.load %arg5[%c4_9, %c64_10] : memref<16x128xf32, #tpu.memory_space<vmem>>, vector<4x64xf32>
    tpu.vector_store %arg5[%c4_9, %c64_10], %19 {strides = array<i32>} : memref<16x128xf32, #tpu.memory_space<vmem>>, vector<4x64xf32>,
    %21 = vector.extract_strided_slice %14 {offsets = [0, 64], sizes = [4, 64], strides = [1, 1]} : vector<4x256xf32> to vector<4x64xf32>
    %c8_11 = arith.constant 8 : index
    %c64_12 = arith.constant 64 : index
    %22 = vector.load %arg5[%c8_11, %c64_12] : memref<16x128xf32, #tpu.memory_space<vmem>>, vector<4x64xf32>
    tpu.vector_store %arg5[%c8_11, %c64_12], %21 {strides = array<i32>} : memref<16x128xf32, #tpu.memory_space<vmem>>, vector<4x64xf32>,
    %23 = vector.extract_strided_slice %14 {offsets = [0, 128], sizes = [4, 64], strides = [1, 1]} : vector<4x256xf32> to vector<4x64xf32>
    %c12_13 = arith.constant 12 : index
    %c64_14 = arith.constant 64 : index
    %24 = vector.load %arg5[%c12_13, %c64_14] : memref<16x128xf32, #tpu.memory_space<vmem>>, vector<4x64xf32>
    tpu.vector_store %arg5[%c12_13, %c64_14], %23 {strides = array<i32>} : memref<16x128xf32, #tpu.memory_space<vmem>>, vector<4x64xf32>,
    %c0_15 = arith.constant 0 : index
    %c0_16 = arith.constant 0 : index
    %25 = vector.load %arg3[%c0_15, %c0_16] : memref<32x17xf32, #tpu.memory_space<vmem>>, vector<32x17xf32>
    %26 = vector.extract_strided_slice %25 {offsets = [0, 0], sizes = [32, 16], strides = [1, 1]} : vector<32x17xf32> to vector<32x16xf32>
    %c0_17 = arith.constant 0 : index
    %c0_18 = arith.constant 0 : index
    %27 = vector.load %arg5[%c0_17, %c0_18] : memref<16x128xf32, #tpu.memory_space<vmem>>, vector<16x128xf32>
    %cst_19 = arith.constant dense<0.000000e+00> : vector<32x128xf32>
    %28 = tpu.matmul %26, %27, %cst_19 {dimension_numbers = #tpu.dot_dimension_numbers<[1], [0], [0], [1], [0, 0, 1, 1], [], []>} : vector<32x16xf32>, vector<16x128xf32>, vector<32x128xf32> -> vector<32x128xf32>
    %29 = vector.extract_strided_slice %25 {offsets = [0, 16], sizes = [32, 1], strides = [1, 1]} : vector<32x17xf32> to vector<32x1xf32>
    %30 = vector.broadcast %29 : vector<32x1xf32> to vector<32x128xf32>
    %31 = arith.addf %28, %30 : vector<32x128xf32>
    %cst_20 = arith.constant 0.000000e+00 : f32
    %32 = vector.broadcast %cst_20 : f32 to vector<32x128xf32>
    %33 = arith.maximumf %31, %32 : vector<32x128xf32>
    %c0_21 = arith.constant 0 : index
    %c0_22 = arith.constant 0 : index
    %34 = vector.load %arg4[%c0_21, %c0_22] : memref<32x128xf32, #tpu.memory_space<vmem>>, vector<32x128xf32>
    tpu.vector_store %arg4[%c0_21, %c0_22], %33 {strides = array<i32>} : memref<32x128xf32, #tpu.memory_space<vmem>>, vector<32x128xf32>,
    return
  }
  func.func @transform_0(%arg0: i32) -> (i32, i32) {
    %c0_i32 = arith.constant 0 : i32
    %c0_i32_0 = arith.constant 0 : i32
    %c0_i32_1 = arith.constant 0 : i32
    return %c0_i32, %c0_i32_0 : i32, i32
  }
  func.func @transform_1(%arg0: i32) -> (i32, i32) {
    %c0_i32 = arith.constant 0 : i32
    %c0_i32_0 = arith.constant 0 : i32
    %c0_i32_1 = arith.constant 0 : i32
    return %c0_i32, %c0_i32_0 : i32, i32
  }
  func.func @transform_2(%arg0: i32) -> (i32, i32) {
    %c0_i32 = arith.constant 0 : i32
    %c0_i32_0 = arith.constant 0 : i32
    %c0_i32_1 = arith.constant 0 : i32
    return %c0_i32, %c0_i32_0 : i32, i32
  }
  func.func @transform_3(%arg0: i32) -> (i32, i32) {
    %c0_i32 = arith.constant 0 : i32
    %c0_i32_0 = arith.constant 0 : i32
    %c0_i32_1 = arith.constant 0 : i32
    return %c0_i32, %c0_i32_0 : i32, i32
  }
}

</mosaic_0001>

<llo_original>
// kernel: fpn_pallas.1
$region0: #{fpn_pallas.1}
  #allocation0 [shape = 'u32[]', space=smem, size = 0x4, offset = 0x4, fixed_abs, tag = 'smem constant byte address 0x4 - core index']
  #allocation1 [shape = 'u32[144,128]{1,0:T(1,128)}', space=vmem, size = 0x12000, scoped, tag = 'internal scratch']
  #allocation2 [shape = 'f32[16,128]{1,0:T(8,128)}', space=vmem, size = 0x2000, scoped, tag = 'scratch operand']
  %s0 = inlined_call_operand.vmem [shape: bf16[8,256], index: 0, kind: input, shape index: {}]
  %s1 = inlined_call_operand.vmem [shape: bf16[256,256], index: 1, kind: input, shape index: {}]
  %s2 = inlined_call_operand.vmem [shape: f32[32,17], index: 2, kind: input, shape index: {}]
  %s3 = inlined_call_operand.vmem [shape: f32[32,128], index: 3, kind: output, shape index: {}]
  %s4 = sld [smem:[#allocation0]]
  $region22: #{fpn_pallas.1} parent=0
    _
  %s6 = ssub.s32 1, %s4
  %s7 = scalar_select 0, %s6, %s4
  // Predicated region
  $region2: #{fpn_pallas.1} parent=0 // pred_check
    _
  $region3: #{fpn_pallas.1} parent=0 // pred_check_branch
    %9 = sbr.rel (0) target = $region5
  $region4: #{fpn_pallas.1} parent=0 // pred_region
    _
  $region5: #{fpn_pallas.1} parent=0 // pred_fallthru
    _
  // Predicated region
  $region6: #{fpn_pallas.1} parent=0 // pred_check
    _
  $region7: #{fpn_pallas.1} parent=0 // pred_check_branch
    %11 = sbr.rel (0) target = $region9
  $region8: #{fpn_pallas.1} parent=0 // pred_region
    _
  $region9: #{fpn_pallas.1} parent=0 // pred_fallthru
    _
  // Predicated region
  $region10: #{fpn_pallas.1} parent=0 // pred_check
    _
  $region11: #{fpn_pallas.1} parent=0 // pred_check_branch
    %13 = sbr.rel (0) target = $region13
  $region12: #{fpn_pallas.1} parent=0 // pred_region
    _
  $region13: #{fpn_pallas.1} parent=0 // pred_fallthru
    _
  %v14 = vld [vmem:[%s0] sm:$0xff]
  %v15 = vld [vmem:[%s1] sm:$0xff]
  %v16 = vld [vmem:[%s1 + $0x8] sm:$0xff]
  %v17 = vld [vmem:[%s1 + $0x10] sm:$0xff]
  %v18 = vld [vmem:[%s1 + $0x18] sm:$0xff]
  %v19 = vld [vmem:[%s1 + $0x20] sm:$0xff]
  %v20 = vld [vmem:[%s1 + $0x28] sm:$0xff]
  %v21 = vld [vmem:[%s1 + $0x30] sm:$0xff]
  %v22 = vld [vmem:[%s1 + $0x38] sm:$0xff]
  %v23 = vld [vmem:[%s1 + $0x40] sm:$0xff]
  %v24 = vld [vmem:[%s1 + $0x48] sm:$0xff]
  %v25 = vld [vmem:[%s1 + $0x50] sm:$0xff]
  %v26 = vld [vmem:[%s1 + $0x58] sm:$0xff]
  %v27 = vld [vmem:[%s1 + $0x60] sm:$0xff]
  %v28 = vld [vmem:[%s1 + $0x68] sm:$0xff]
  %v29 = vld [vmem:[%s1 + $0x70] sm:$0xff]
  %v30 = vld [vmem:[%s1 + $0x78] sm:$0xff]
  %v31 = vld [vmem:[%s1 + $0x80] sm:$0xff]
  %v32 = vld [vmem:[%s1 + $0x88] sm:$0xff]
  %v33 = vld [vmem:[%s1 + $0x90] sm:$0xff]
  %v34 = vld [vmem:[%s1 + $0x98] sm:$0xff]
  %v35 = vld [vmem:[%s1 + $0xa0] sm:$0xff]
  %v36 = vld [vmem:[%s1 + $0xa8] sm:$0xff]
  %v37 = vld [vmem:[%s1 + $0xb0] sm:$0xff]
  %v38 = vld [vmem:[%s1 + $0xb8] sm:$0xff]
  %v39 = vld [vmem:[%s1 + $0xc0] sm:$0xff]
  %v40 = vld [vmem:[%s1 + $0xc8] sm:$0xff]
  %v41 = vld [vmem:[%s1 + $0xd0] sm:$0xff]
  %v42 = vld [vmem:[%s1 + $0xd8] sm:$0xff]
  %v43 = vld [vmem:[%s1 + $0xe0] sm:$0xff]
  %v44 = vld [vmem:[%s1 + $0xe8] sm:$0xff]
  %v45 = vld [vmem:[%s1 + $0xf0] sm:$0xff]
  %v46 = vld [vmem:[%s1 + $0xf8] sm:$0xff]
  %v48 = vunpack.c.l.b16 %v14
  %v49 = vunpack.c.h.b16 %v14
  %v50 = vpack.c.b16 %v48, %v48
  %v51 = vpack.c.b16 %v49, %v49
  %v86 = vunpack.c.l.b16 %v15
  %v87 = vunpack.c.h.b16 %v15
  %v88 = vunpack.c.l.b16 %v16
  %v89 = vunpack.c.h.b16 %v16
  %v90 = vunpack.c.l.b16 %v17
  %v91 = vunpack.c.h.b16 %v17
  %v92 = vunpack.c.l.b16 %v18
  %v93 = vunpack.c.h.b16 %v18
  %v94 = vunpack.c.l.b16 %v19
  %v95 = vunpack.c.h.b16 %v19
  %v96 = vunpack.c.l.b16 %v20
  %v97 = vunpack.c.h.b16 %v20
  %v98 = vunpack.c.l.b16 %v21
  %v99 = vunpack.c.h.b16 %v21
  %v100 = vunpack.c.l.b16 %v22
  %v101 = vunpack.c.h.b16 %v22
  %v102 = vunpack.c.l.b16 %v23
  %v103 = vunpack.c.h.b16 %v23
  %v104 = vunpack.c.l.b16 %v24
  %v105 = vunpack.c.h.b16 %v24
  %v106 = vunpack.c.l.b16 %v25
  %v107 = vunpack.c.h.b16 %v25
  %v108 = vunpack.c.l.b16 %v26
  %v109 = vunpack.c.h.b16 %v26
  %v110 = vunpack.c.l.b16 %v27
  %v111 = vunpack.c.h.b16 %v27
  %v112 = vunpack.c.l.b16 %v28
  %v113 = vunpack.c.h.b16 %v28
  %v114 = vunpack.c.l.b16 %v29
  %v115 = vunpack.c.h.b16 %v29
  %v116 = vunpack.c.l.b16 %v30
  %v117 = vunpack.c.h.b16 %v30
  %v118 = vunpack.c.l.b16 %v31
  %v119 = vunpack.c.h.b16 %v31
  %v120 = vunpack.c.l.b16 %v32
  %v121 = vunpack.c.h.b16 %v32
  %v122 = vunpack.c.l.b16 %v33
  %v123 = vunpack.c.h.b16 %v33
  %v124 = vunpack.c.l.b16 %v34
  %v125 = vunpack.c.h.b16 %v34
  %v126 = vunpack.c.l.b16 %v35
  %v127 = vunpack.c.h.b16 %v35
  %v128 = vunpack.c.l.b16 %v36
  %v129 = vunpack.c.h.b16 %v36
  %v130 = vunpack.c.l.b16 %v37
  %v131 = vunpack.c.h.b16 %v37
  %v132 = vunpack.c.l.b16 %v38
  %v133 = vunpack.c.h.b16 %v38
  %v134 = vunpack.c.l.b16 %v39
  %v135 = vunpack.c.h.b16 %v39
  %v136 = vunpack.c.l.b16 %v40
  %v137 = vunpack.c.h.b16 %v40
  %v138 = vunpack.c.l.b16 %v41
  %v139 = vunpack.c.h.b16 %v41
  %v140 = vunpack.c.l.b16 %v42
  %v141 = vunpack.c.h.b16 %v42
  %v142 = vunpack.c.l.b16 %v43
  %v143 = vunpack.c.h.b16 %v43
  %v144 = vunpack.c.l.b16 %v44
  %v145 = vunpack.c.h.b16 %v44
  %v146 = vunpack.c.l.b16 %v45
  %v147 = vunpack.c.h.b16 %v45
  %v148 = vunpack.c.l.b16 %v46
  %v149 = vunpack.c.h.b16 %v46
  %v150 = vpack.c.b16 %v88, %v86
  %v151 = vpack.c.b16 %v89, %v87
  %v152 = vpack.c.b16 %v92, %v90
  %v153 = vpack.c.b16 %v93, %v91
  %v154 = vpack.c.b16 %v96, %v94
  %v155 = vpack.c.b16 %v97, %v95
  %v156 = vpack.c.b16 %v100, %v98
  %v157 = vpack.c.b16 %v101, %v99
  %v158 = vpack.c.b16 %v104, %v102
  %v159 = vpack.c.b16 %v105, %v103
  %v160 = vpack.c.b16 %v108, %v106
  %v161 = vpack.c.b16 %v109, %v107
  %v162 = vpack.c.b16 %v112, %v110
  %v163 = vpack.c.b16 %v113, %v111
  %v164 = vpack.c.b16 %v116, %v114
  %v165 = vpack.c.b16 %v117, %v115
  %v166 = vpack.c.b16 %v120, %v118
  %v167 = vpack.c.b16 %v121, %v119
  %v168 = vpack.c.b16 %v124, %v122
  %v169 = vpack.c.b16 %v125, %v123
  %v170 = vpack.c.b16 %v128, %v126
  %v171 = vpack.c.b16 %v129, %v127
  %v172 = vpack.c.b16 %v132, %v130
  %v173 = vpack.c.b16 %v133, %v131
  %v174 = vpack.c.b16 %v136, %v134
  %v175 = vpack.c.b16 %v137, %v135
  %v176 = vpack.c.b16 %v140, %v138
  %v177 = vpack.c.b16 %v141, %v139
  %v178 = vpack.c.b16 %v144, %v142
  %v179 = vpack.c.b16 %v145, %v143
  %v180 = vpack.c.b16 %v148, %v146
  %v181 = vpack.c.b16 %v149, %v147
  %214 = vmatprep.subr.bf16.mxu0 %v151
  %215 = vmatpush1.bf16.msra.mxu0 %v150
  %216 = vmatprep.subr.bf16.mxu0 %v153
  %217 = vmatpush1.bf16.msra.mxu0 %v152
  %218 = vmatprep.subr.bf16.mxu0 %v155
  %219 = vmatpush1.bf16.msra.mxu0 %v154
  %220 = vmatprep.subr.bf16.mxu0 %v157
  %221 = vmatpush1.bf16.msra.mxu0 %v156
  %222 = vmatprep.subr.bf16.mxu0 %v159
  %223 = vmatpush1.bf16.msra.mxu0 %v158
  %224 = vmatprep.subr.bf16.mxu0 %v161
  %225 = vmatpush1.bf16.msra.mxu0 %v160
  %226 = vmatprep.subr.bf16.mxu0 %v163
  %227 = vmatpush1.bf16.msra.mxu0 %v162
  %228 = vmatprep.subr.bf16.mxu0 %v165
  %229 = vmatpush1.bf16.msra.mxu0 %v164
  %230 = vmatprep.subr.bf16.mxu0 %v167
  %231 = vmatpush1.bf16.msra.mxu0 %v166
  %232 = vmatprep.subr.bf16.mxu0 %v169
  %233 = vmatpush1.bf16.msra.mxu0 %v168
  %234 = vmatprep.subr.bf16.mxu0 %v171
  %235 = vmatpush1.bf16.msra.mxu0 %v170
  %236 = vmatprep.subr.bf16.mxu0 %v173
  %237 = vmatpush1.bf16.msra.mxu0 %v172
  %238 = vmatprep.subr.bf16.mxu0 %v175
  %239 = vmatpush1.bf16.msra.mxu0 %v174
  %240 = vmatprep.subr.bf16.mxu0 %v177
  %241 = vmatpush1.bf16.msra.mxu0 %v176
  %242 = vmatprep.subr.bf16.mxu0 %v179
  %243 = vmatpush1.bf16.msra.mxu0 %v178
  %244 = vmatprep.subr.bf16.mxu0 %v181
  %245 = vmatpush1.bf16.msra.mxu0 %v180
  %246 = vmatprep.mubr.bf16.mxu0 %v51
  %247 = vmatmul.mubr.bf16.gmra.mrb[0].mxu0 %v50
  %v248 = vpop.f32.mrb[0].mxu0
  %v249 = vadd.f32 0.0, %v248
  %v250 = vpop.f32.mrb[0].mxu0
  %v251 = vadd.f32 0.0, %v250
  %v252 = vpop.f32.mrb[0].mxu0
  %v253 = vpop.f32.mrb[0].mxu0
  %254 = vdwg.mxu0
  %256 = vset.pattern.permute.xlu0 64
  %257 = vperm.xlu0 %256, %v251
  %v258 = vpop.permute.xlu0 %257
  %vm260 = vcmask 519168
  %261 = vst.msk [vmem:[#allocation2] sm:$0xf] %vm260, %v258
  %262 = vst.msk [vmem:[#allocation2 + $0x4] sm:$0xf] %vm260, %v249
  %264 = vrot.lane.b32.xlu0 %v249, 64
  %v265 = vpop.permute.xlu0 %264
  %267 = vst.msk [vmem:[#allocation2 + $0x8] sm:$0xf] %vm260, %v265
  %268 = vst.msk [vmem:[#allocation2 + $0xc] sm:$0xf] %vm260, %v251
  %vm269 = vcmask 1048068
  %270 = vst.msk [vmem:[#allocation2 - $0x4] sm:$0xf0] %vm269, %v258
  %271 = vst.msk [vmem:[#allocation2] sm:$0xf0] %vm269, %v265
  %272 = vst.msk [vmem:[#allocation2 + $0x4] sm:$0xf0] %vm269, %v249
  %273 = vrot.lane.b32.xlu0 %v251, 64
  %v274 = vpop.permute.xlu0 %273
  %276 = vst.msk [vmem:[#allocation2 + $0x8] sm:$0xf0] %vm269, %v274
  %v277 = vld [vmem:[%s2] sm:$0xff]
  %v278 = vld [vmem:[%s2 + $0x8] sm:$0xff]
  %v279 = vld [vmem:[%s2 + $0x10] sm:$0xff]
  %v280 = vld [vmem:[%s2 + $0x18] sm:$0xff]
  %v281 = vld [vmem:[#allocation2] sm:$0xff]
  %v282 = vld [vmem:[#allocation2 + $0x8] sm:$0xff]
  %284 = vset.pattern.permute.xlu0 16
  %285 = vperm.xlu0 %284, %v277
  %v286 = vpop.permute.xlu0 %285
  %289 = vset.pattern.permute.xlu0 16
  %290 = vperm.xlu0 %289, %v278
  %v291 = vpop.permute.xlu0 %290
  %294 = vset.pattern.permute.xlu0 16
  %295 = vperm.xlu0 %294, %v279
  %v296 = vpop.permute.xlu0 %295
  %299 = vset.pattern.permute.xlu0 16
  %300 = vperm.xlu0 %299, %v280
  %v301 = vpop.permute.xlu0 %300
  %vm303 = vcmask 130048
  %v304 = vsel %vm303, %v277, 0
  %v306 = vsel %vm303, %v278, 0
  %v308 = vsel %vm303, %v279, 0
  %v310 = vsel %vm303, %v280, 0
  %312 = vmatprep.subr.mxu0 0.0
  %313 = vmatpush1.msra.mxu0 %v281
  %314 = vmatprep.subr.mxu0 0.0
  %315 = vmatpush1.msra.mxu0 %v282
  %316 = vmatprep.subr.mxu0 0.0
  %317 = vmatpush1.msra.mxu0 0.0
  %318 = vmatprep.subr.mxu0 0.0
  %319 = vmatpush1.msra.mxu0 0.0
  %320 = vmatprep.subr.mxu0 0.0
  %321 = vmatpush1.msra.mxu0 0.0
  %322 = vmatprep.subr.mxu0 0.0
  %323 = vmatpush1.msra.mxu0 0.0
  %324 = vmatprep.subr.mxu0 0.0
  %325 = vmatpush1.msra.mxu0 0.0
  %326 = vmatprep.subr.mxu0 0.0
  %327 = vmatpush1.msra.mxu0 0.0
  %328 = vmatprep.subr.mxu0 0.0
  %329 = vmatpush1.msra.mxu0 0.0
  %330 = vmatprep.subr.mxu0 0.0
  %331 = vmatpush1.msra.mxu0 0.0
  %332 = vmatprep.subr.mxu0 0.0
  %333 = vmatpush1.msra.mxu0 0.0
  %334 = vmatprep.subr.mxu0 0.0
  %335 = vmatpush1.msra.mxu0 0.0
  %336 = vmatprep.subr.mxu0 0.0
  %337 = vmatpush1.msra.mxu0 0.0
  %338 = vmatprep.subr.mxu0 0.0
  %339 = vmatpush1.msra.mxu0 0.0
  %340 = vmatprep.subr.mxu0 0.0
  %341 = vmatpush1.msra.mxu0 0.0
  %342 = vmatprep.subr.mxu0 0.0
  %343 = vmatpush1.msra.mxu0 0.0
  %344 = vmatprep.subr.mxu0 0.0
  %345 = vmatpush1.msra.mxu0 0.0
  %346 = vmatprep.subr.mxu0 0.0
  %347 = vmatpush1.msra.mxu0 0.0
  %348 = vmatprep.subr.mxu0 0.0
  %349 = vmatpush1.msra.mxu0 0.0
  %350 = vmatprep.subr.mxu0 0.0
  %351 = vmatpush1.msra.mxu0 0.0
  %352 = vmatprep.subr.mxu0 0.0
  %353 = vmatpush1.msra.mxu0 0.0
  %354 = vmatprep.subr.mxu0 0.0
  %355 = vmatpush1.msra.mxu0 0.0
  %356 = vmatprep.subr.mxu0 0.0
  %357 = vmatpush1.msra.mxu0 0.0
  %358 = vmatprep.subr.mxu0 0.0
  %359 = vmatpush1.msra.mxu0 0.0
  %360 = vmatprep.subr.mxu0 0.0
  %361 = vmatpush1.msra.mxu0 0.0
  %362 = vmatprep.subr.mxu0 0.0
  %363 = vmatpush1.msra.mxu0 0.0
  %364 = vmatprep.subr.mxu0 0.0
  %365 = vmatpush1.msra.mxu0 0.0
  %366 = vmatprep.subr.mxu0 0.0
  %367 = vmatpush1.msra.mxu0 0.0
  %368 = vmatprep.subr.mxu0 0.0
  %369 = vmatpush1.msra.mxu0 0.0
  %370 = vmatprep.subr.mxu0 0.0
  %371 = vmatpush1.msra.mxu0 0.0
  %372 = vmatprep.subr.mxu0 0.0
  %373 = vmatpush1.msra.mxu0 0.0
  %374 = vmatprep.subr.mxu0 0.0
  %375 = vmatpush1.msra.mxu0 0.0
  %376 = vmatprep.mubr.f32.mxu0 0.0
  %377 = vmatmul.mubr.f32.gmra.mrb[0].mxu0 %v304
  %v378 = vpop.f32.mrb[0].mxu0
  %v379 = vadd.f32 %v286, %v378
  %v380 = vpop.f32.mrb[0].mxu0
  %381 = vmatprep.mubr.f32.mxu0 0.0
  %382 = vmatmul.mubr.f32.gmra.mrb[0].mxu0 %v306
  %v383 = vpop.f32.mrb[0].mxu0
  %v384 = vadd.f32 %v291, %v383
  %v385 = vpop.f32.mrb[0].mxu0
  %386 = vmatprep.mubr.f32.mxu0 0.0
  %387 = vmatmul.mubr.f32.gmra.mrb[0].mxu0 %v308
  %v388 = vpop.f32.mrb[0].mxu0
  %v389 = vadd.f32 %v296, %v388
  %v390 = vpop.f32.mrb[0].mxu0
  %391 = vmatprep.mubr.f32.mxu0 0.0
  %392 = vmatmul.mubr.f32.gmra.mrb[0].mxu0 %v310
  %v393 = vpop.f32.mrb[0].mxu0
  %v394 = vadd.f32 %v301, %v393
  %v395 = vpop.f32.mrb[0].mxu0
  %396 = vdwg.mxu0
  %v397 = vmax.f32 %v379, 0.0
  %v398 = vmax.f32 %v384, 0.0
  %v399 = vmax.f32 %v389, 0.0
  %v400 = vmax.f32 %v394, 0.0
  %401 = vst [vmem:[%s3] sm:$0xff] %v397
  %402 = vst [vmem:[%s3 + $0x8] sm:$0xff] %v398
  %403 = vst [vmem:[%s3 + $0x10] sm:$0xff] %v399
  %404 = vst [vmem:[%s3 + $0x18] sm:$0xff] %v400
  // Predicated region
  $region14: #{fpn_pallas.1} parent=0 // pred_check
    _
  $region15: #{fpn_pallas.1} parent=0 // pred_check_branch
    %406 = sbr.rel (0) target = $region17
  $region16: #{fpn_pallas.1} parent=0 // pred_region
    _
  $region17: #{fpn_pallas.1} parent=0 // pred_fallthru
    _
  // Predicated region
  $region18: #{fpn_pallas.1} parent=0 // pred_check
    _
  $region19: #{fpn_pallas.1} parent=0 // pred_check_branch
    %408 = sbr.rel (0) target = $region21
  $region20: #{fpn_pallas.1} parent=0 // pred_region
    _
  $region21: #{fpn_pallas.1} parent=0 // pred_fallthru
    _

</llo_original>
